<compile_context>
chip_gen: v7x
topology: tpu7x:2x2x1
jax: 0.10.0
libtpu: 0.0.40
codegen_flags: <defaults>
</compile_context>

<pallas_src>
import functools

import jax
import jax.numpy as jnp
from jax.experimental import pallas as pl
from jax.experimental.pallas import tpu as pltpu


N_INPUT = 12
N_HIDDEN = 4
N_OUTPUT = 18
LANE = 128
FLOPS_PER_SAMPLE = 2 * (N_INPUT * N_HIDDEN + 4 * N_HIDDEN * N_HIDDEN
                        + N_HIDDEN * N_OUTPUT)  # = 368


def mlp_kernel(x_ref,
               w1_ref, b1_ref, w2_ref, b2_ref, w3_ref, b3_ref,
               w4_ref, b4_ref, w5_ref, b5_ref, w6_ref, b6_ref,
               o_ref):
    # Activations are (features, TILE_B): features on sublanes, batch on lanes.
    h = x_ref[...]                                       # (N_INPUT, TILE_B)

    def layer(h, w_ref, b_ref):
        # W is (out, in); bias is (out, 1) and broadcasts along lanes.
        z = jnp.dot(w_ref[...], h, preferred_element_type=jnp.float32) + b_ref[...]
        return jnp.maximum(z, 0.0)

    h = layer(h, w1_ref, b1_ref)
    h = layer(h, w2_ref, b2_ref)
    h = layer(h, w3_ref, b3_ref)
    h = layer(h, w4_ref, b4_ref)
    h = layer(h, w5_ref, b5_ref)
    # Final layer: no ReLU.
    o_ref[...] = (jnp.dot(w6_ref[...], h, preferred_element_type=jnp.float32)
                  + b6_ref[...]).astype(o_ref.dtype)


def init_params(key):
    """PyTorch-style Linear init. Weights kept in native (out, in) layout and
    biases as (out, 1) columns so the kernel computes W @ h + b."""
    dims = [(N_INPUT, N_HIDDEN),
            (N_HIDDEN, N_HIDDEN),
            (N_HIDDEN, N_HIDDEN),
            (N_HIDDEN, N_HIDDEN),
            (N_HIDDEN, N_HIDDEN),
            (N_HIDDEN, N_OUTPUT)]
    params = []
    for (fan_in, fan_out) in dims:
        key, kw, kb = jax.random.split(key, 3)
        bound = 1.0 / jnp.sqrt(fan_in)  # PyTorch default uniform bound
        w = jax.random.uniform(kw, (fan_out, fan_in), jnp.float32, -bound, bound)
        b = jax.random.uniform(kb, (fan_out, 1), jnp.float32, -bound, bound)
        params.append((w, b))
    return params


@functools.partial(jax.jit, static_argnames=("tile_b",))
def mynn_forward(x, params, *, tile_b=4096):
    batch = x.shape[0]

    # Batch tile on lanes: multiple of 128, capped so VMEM buffers stay small
    # on every generation (double-buffered x + out tiles well under 2 MiB).
    tile_b = min(tile_b, max(LANE, pl.cdiv(batch, LANE) * LANE))
    padded = pl.cdiv(batch, tile_b) * tile_b
    grid = (padded // tile_b,)

    # Transpose + zero-pad in the wrapper (layout plumbing, not kernel work).
    xt = jnp.zeros((N_INPUT, padded), x.dtype)
    xt = xt.at[:, :batch].set(x.T)

    flat_args = [xt]
    in_specs = [pl.BlockSpec((N_INPUT, tile_b), lambda i: (0, i))]
    weight_bytes = 0
    for (w, b) in params:
        flat_args.extend([w, b])
        # Constant index_map -> weights/biases stay VMEM-resident across grid.
        in_specs.append(pl.BlockSpec(w.shape, lambda i: (0, 0)))
        in_specs.append(pl.BlockSpec(b.shape, lambda i: (0, 0)))
        weight_bytes += (w.size + b.size) * 4

    out_t = pl.pallas_call(
        mlp_kernel,
        out_shape=jax.ShapeDtypeStruct((N_OUTPUT, padded), jnp.float32),
        grid=grid,
        in_specs=in_specs,
        out_specs=pl.BlockSpec((N_OUTPUT, tile_b), lambda i: (0, i)),
        compiler_params=pltpu.CompilerParams(
            dimension_semantics=("parallel",)),
        cost_estimate=pl.CostEstimate(
            flops=FLOPS_PER_SAMPLE * padded,
            transcendentals=0,
            bytes_accessed=padded * 4 * (N_INPUT + N_OUTPUT) + weight_bytes),
    )(*flat_args)

    # Back to the PyTorch-facing (batch, N_OUTPUT) layout, drop padding.
    return out_t[:, :batch].T


def mynn_reference(x, params):
    h = x
    for i, (w, b) in enumerate(params):
        h = h @ w.T + b[:, 0]
        if i < len(params) - 1:
            h = jnp.maximum(h, 0.0)
    return h


if __name__ == "__main__":
    key = jax.random.PRNGKey(0)
    key, kx, kp = jax.random.split(key, 3)

    batch = 8
    x = jax.random.normal(kx, (batch, N_INPUT), jnp.float32)
    params = init_params(kp)

    out = mynn_forward(x, params)
    out = jax.block_until_ready(out)

    ref = mynn_reference(x, params)
    assert out.shape == (batch, N_OUTPUT)
    assert jnp.allclose(out, ref, atol=1e-5, rtol=1e-5)

    print("KERNEL_OK")
</pallas_src>

<mosaic_0001>
module attributes {stable_mosaic.version = 11 : i64} {
  func.func @mlp_kernel(%arg0: i32, %arg1: memref<12x128xf32, #tpu.memory_space<vmem>>, %arg2: memref<4x12xf32, #tpu.memory_space<vmem>>, %arg3: memref<4x1xf32, #tpu.memory_space<vmem>>, %arg4: memref<4x4xf32, #tpu.memory_space<vmem>>, %arg5: memref<4x1xf32, #tpu.memory_space<vmem>>, %arg6: memref<4x4xf32, #tpu.memory_space<vmem>>, %arg7: memref<4x1xf32, #tpu.memory_space<vmem>>, %arg8: memref<4x4xf32, #tpu.memory_space<vmem>>, %arg9: memref<4x1xf32, #tpu.memory_space<vmem>>, %arg10: memref<4x4xf32, #tpu.memory_space<vmem>>, %arg11: memref<4x1xf32, #tpu.memory_space<vmem>>, %arg12: memref<18x4xf32, #tpu.memory_space<vmem>>, %arg13: memref<18x1xf32, #tpu.memory_space<vmem>>, %arg14: memref<18x128xf32, #tpu.memory_space<vmem>>) attributes {dimension_semantics = [#tpu.dimension_semantics<parallel>], iteration_bounds = array<i64: 1>, scalar_prefetch = 0 : i64, scratch_operands = 0 : i64, tpu.core_type = #tpu.core_type<tc>, window_params = [{transform_indices = @transform_0, window_bounds = array<i64: 12, 128>}, {pipeline_mode = #tpu.pipeline_mode<synchronous>, transform_indices = @transform_1, window_bounds = array<i64: 4, 12>}, {pipeline_mode = #tpu.pipeline_mode<synchronous>, transform_indices = @transform_2, window_bounds = array<i64: 4, 1>}, {pipeline_mode = #tpu.pipeline_mode<synchronous>, transform_indices = @transform_3, window_bounds = array<i64: 4, 4>}, {pipeline_mode = #tpu.pipeline_mode<synchronous>, transform_indices = @transform_4, window_bounds = array<i64: 4, 1>}, {pipeline_mode = #tpu.pipeline_mode<synchronous>, transform_indices = @transform_5, window_bounds = array<i64: 4, 4>}, {pipeline_mode = #tpu.pipeline_mode<synchronous>, transform_indices = @transform_6, window_bounds = array<i64: 4, 1>}, {pipeline_mode = #tpu.pipeline_mode<synchronous>, transform_indices = @transform_7, window_bounds = array<i64: 4, 4>}, {pipeline_mode = #tpu.pipeline_mode<synchronous>, transform_indices = @transform_8, window_bounds = array<i64: 4, 1>}, {pipeline_mode = #tpu.pipeline_mode<synchronous>, transform_indices = @transform_9, window_bounds = array<i64: 4, 4>}, {pipeline_mode = #tpu.pipeline_mode<synchronous>, transform_indices = @transform_10, window_bounds = array<i64: 4, 1>}, {pipeline_mode = #tpu.pipeline_mode<synchronous>, transform_indices = @transform_11, window_bounds = array<i64: 18, 4>}, {pipeline_mode = #tpu.pipeline_mode<synchronous>, transform_indices = @transform_12, window_bounds = array<i64: 18, 1>}, {transform_indices = @transform_13, window_bounds = array<i64: 18, 128>}]} {
    %c0 = arith.constant 0 : index
    %c0_0 = arith.constant 0 : index
    %0 = vector.load %arg1[%c0, %c0_0] : memref<12x128xf32, #tpu.memory_space<vmem>>, vector<12x128xf32>
    %c0_1 = arith.constant 0 : index
    %c0_2 = arith.constant 0 : index
    %1 = vector.load %arg2[%c0_1, %c0_2] : memref<4x12xf32, #tpu.memory_space<vmem>>, vector<4x12xf32>
    %cst = arith.constant dense<0.000000e+00> : vector<4x128xf32>
    %2 = tpu.matmul %1, %0, %cst {dimension_numbers = #tpu.dot_dimension_numbers<[1], [0], [0], [1], [0, 0, 1, 1], [], []>} : vector<4x12xf32>, vector<12x128xf32>, vector<4x128xf32> -> vector<4x128xf32>
    %c0_3 = arith.constant 0 : index
    %c0_4 = arith.constant 0 : index
    %3 = vector.load %arg3[%c0_3, %c0_4] : memref<4x1xf32, #tpu.memory_space<vmem>>, vector<4x1xf32>
    %4 = vector.broadcast %3 : vector<4x1xf32> to vector<4x128xf32>
    %5 = arith.addf %2, %4 : vector<4x128xf32>
    %cst_5 = arith.constant 0.000000e+00 : f32
    %6 = vector.broadcast %cst_5 : f32 to vector<4x128xf32>
    %7 = arith.maximumf %5, %6 : vector<4x128xf32>
    %c0_6 = arith.constant 0 : index
    %c0_7 = arith.constant 0 : index
    %8 = vector.load %arg4[%c0_6, %c0_7] : memref<4x4xf32, #tpu.memory_space<vmem>>, vector<4x4xf32>
    %cst_8 = arith.constant dense<0.000000e+00> : vector<4x128xf32>
    %9 = tpu.matmul %8, %7, %cst_8 {dimension_numbers = #tpu.dot_dimension_numbers<[1], [0], [0], [1], [0, 0, 1, 1], [], []>} : vector<4x4xf32>, vector<4x128xf32>, vector<4x128xf32> -> vector<4x128xf32>
    %c0_9 = arith.constant 0 : index
    %c0_10 = arith.constant 0 : index
    %10 = vector.load %arg5[%c0_9, %c0_10] : memref<4x1xf32, #tpu.memory_space<vmem>>, vector<4x1xf32>
    %11 = vector.broadcast %10 : vector<4x1xf32> to vector<4x128xf32>
    %12 = arith.addf %9, %11 : vector<4x128xf32>
    %cst_11 = arith.constant 0.000000e+00 : f32
    %13 = vector.broadcast %cst_11 : f32 to vector<4x128xf32>
    %14 = arith.maximumf %12, %13 : vector<4x128xf32>
    %c0_12 = arith.constant 0 : index
    %c0_13 = arith.constant 0 : index
    %15 = vector.load %arg6[%c0_12, %c0_13] : memref<4x4xf32, #tpu.memory_space<vmem>>, vector<4x4xf32>
    %cst_14 = arith.constant dense<0.000000e+00> : vector<4x128xf32>
    %16 = tpu.matmul %15, %14, %cst_14 {dimension_numbers = #tpu.dot_dimension_numbers<[1], [0], [0], [1], [0, 0, 1, 1], [], []>} : vector<4x4xf32>, vector<4x128xf32>, vector<4x128xf32> -> vector<4x128xf32>
    %c0_15 = arith.constant 0 : index
    %c0_16 = arith.constant 0 : index
    %17 = vector.load %arg7[%c0_15, %c0_16] : memref<4x1xf32, #tpu.memory_space<vmem>>, vector<4x1xf32>
    %18 = vector.broadcast %17 : vector<4x1xf32> to vector<4x128xf32>
    %19 = arith.addf %16, %18 : vector<4x128xf32>
    %cst_17 = arith.constant 0.000000e+00 : f32
    %20 = vector.broadcast %cst_17 : f32 to vector<4x128xf32>
    %21 = arith.maximumf %19, %20 : vector<4x128xf32>
    %c0_18 = arith.constant 0 : index
    %c0_19 = arith.constant 0 : index
    %22 = vector.load %arg8[%c0_18, %c0_19] : memref<4x4xf32, #tpu.memory_space<vmem>>, vector<4x4xf32>
    %cst_20 = arith.constant dense<0.000000e+00> : vector<4x128xf32>
    %23 = tpu.matmul %22, %21, %cst_20 {dimension_numbers = #tpu.dot_dimension_numbers<[1], [0], [0], [1], [0, 0, 1, 1], [], []>} : vector<4x4xf32>, vector<4x128xf32>, vector<4x128xf32> -> vector<4x128xf32>
    %c0_21 = arith.constant 0 : index
    %c0_22 = arith.constant 0 : index
    %24 = vector.load %arg9[%c0_21, %c0_22] : memref<4x1xf32, #tpu.memory_space<vmem>>, vector<4x1xf32>
    %25 = vector.broadcast %24 : vector<4x1xf32> to vector<4x128xf32>
    %26 = arith.addf %23, %25 : vector<4x128xf32>
    %cst_23 = arith.constant 0.000000e+00 : f32
    %27 = vector.broadcast %cst_23 : f32 to vector<4x128xf32>
    %28 = arith.maximumf %26, %27 : vector<4x128xf32>
    %c0_24 = arith.constant 0 : index
    %c0_25 = arith.constant 0 : index
    %29 = vector.load %arg10[%c0_24, %c0_25] : memref<4x4xf32, #tpu.memory_space<vmem>>, vector<4x4xf32>
    %cst_26 = arith.constant dense<0.000000e+00> : vector<4x128xf32>
    %30 = tpu.matmul %29, %28, %cst_26 {dimension_numbers = #tpu.dot_dimension_numbers<[1], [0], [0], [1], [0, 0, 1, 1], [], []>} : vector<4x4xf32>, vector<4x128xf32>, vector<4x128xf32> -> vector<4x128xf32>
    %c0_27 = arith.constant 0 : index
    %c0_28 = arith.constant 0 : index
    %31 = vector.load %arg11[%c0_27, %c0_28] : memref<4x1xf32, #tpu.memory_space<vmem>>, vector<4x1xf32>
    %32 = vector.broadcast %31 : vector<4x1xf32> to vector<4x128xf32>
    %33 = arith.addf %30, %32 : vector<4x128xf32>
    %cst_29 = arith.constant 0.000000e+00 : f32
    %34 = vector.broadcast %cst_29 : f32 to vector<4x128xf32>
    %35 = arith.maximumf %33, %34 : vector<4x128xf32>
    %c0_30 = arith.constant 0 : index
    %c0_31 = arith.constant 0 : index
    %36 = vector.load %arg12[%c0_30, %c0_31] : memref<18x4xf32, #tpu.memory_space<vmem>>, vector<18x4xf32>
    %cst_32 = arith.constant dense<0.000000e+00> : vector<18x128xf32>
    %37 = tpu.matmul %36, %35, %cst_32 {dimension_numbers = #tpu.dot_dimension_numbers<[1], [0], [0], [1], [0, 0, 1, 1], [], []>} : vector<18x4xf32>, vector<4x128xf32>, vector<18x128xf32> -> vector<18x128xf32>
    %c0_33 = arith.constant 0 : index
    %c0_34 = arith.constant 0 : index
    %38 = vector.load %arg13[%c0_33, %c0_34] : memref<18x1xf32, #tpu.memory_space<vmem>>, vector<18x1xf32>
    %39 = vector.broadcast %38 : vector<18x1xf32> to vector<18x128xf32>
    %40 = arith.addf %37, %39 : vector<18x128xf32>
    %c0_35 = arith.constant 0 : index
    %c0_36 = arith.constant 0 : index
    %41 = vector.load %arg14[%c0_35, %c0_36] : memref<18x128xf32, #tpu.memory_space<vmem>>, vector<18x128xf32>
    tpu.vector_store %arg14[%c0_35, %c0_36], %40 {strides = array<i32>} : memref<18x128xf32, #tpu.memory_space<vmem>>, vector<18x128xf32>,
    return
  }
  func.func @transform_0(%arg0: i32) -> (i32, i32) {
    %c0_i32 = arith.constant 0 : i32
    %c0_i32_0 = arith.constant 0 : i32
    return %c0_i32, %arg0 : i32, i32
  }
  func.func @transform_1(%arg0: i32) -> (i32, i32) {
    %c0_i32 = arith.constant 0 : i32
    %c0_i32_0 = arith.constant 0 : i32
    %c0_i32_1 = arith.constant 0 : i32
    return %c0_i32, %c0_i32_0 : i32, i32
  }
  func.func @transform_2(%arg0: i32) -> (i32, i32) {
    %c0_i32 = arith.constant 0 : i32
    %c0_i32_0 = arith.constant 0 : i32
    %c0_i32_1 = arith.constant 0 : i32
    return %c0_i32, %c0_i32_0 : i32, i32
  }
  func.func @transform_3(%arg0: i32) -> (i32, i32) {
    %c0_i32 = arith.constant 0 : i32
    %c0_i32_0 = arith.constant 0 : i32
    %c0_i32_1 = arith.constant 0 : i32
    return %c0_i32, %c0_i32_0 : i32, i32
  }
  func.func @transform_4(%arg0: i32) -> (i32, i32) {
    %c0_i32 = arith.constant 0 : i32
    %c0_i32_0 = arith.constant 0 : i32
    %c0_i32_1 = arith.constant 0 : i32
    return %c0_i32, %c0_i32_0 : i32, i32
  }
  func.func @transform_5(%arg0: i32) -> (i32, i32) {
    %c0_i32 = arith.constant 0 : i32
    %c0_i32_0 = arith.constant 0 : i32
    %c0_i32_1 = arith.constant 0 : i32
    return %c0_i32, %c0_i32_0 : i32, i32
  }
  func.func @transform_6(%arg0: i32) -> (i32, i32) {
    %c0_i32 = arith.constant 0 : i32
    %c0_i32_0 = arith.constant 0 : i32
    %c0_i32_1 = arith.constant 0 : i32
    return %c0_i32, %c0_i32_0 : i32, i32
  }
  func.func @transform_7(%arg0: i32) -> (i32, i32) {
    %c0_i32 = arith.constant 0 : i32
    %c0_i32_0 = arith.constant 0 : i32
    %c0_i32_1 = arith.constant 0 : i32
    return %c0_i32, %c0_i32_0 : i32, i32
  }
  func.func @transform_8(%arg0: i32) -> (i32, i32) {
    %c0_i32 = arith.constant 0 : i32
    %c0_i32_0 = arith.constant 0 : i32
    %c0_i32_1 = arith.constant 0 : i32
    return %c0_i32, %c0_i32_0 : i32, i32
  }
  func.func @transform_9(%arg0: i32) -> (i32, i32) {
    %c0_i32 = arith.constant 0 : i32
    %c0_i32_0 = arith.constant 0 : i32
    %c0_i32_1 = arith.constant 0 : i32
    return %c0_i32, %c0_i32_0 : i32, i32
  }
  func.func @transform_10(%arg0: i32) -> (i32, i32) {
    %c0_i32 = arith.constant 0 : i32
    %c0_i32_0 = arith.constant 0 : i32
    %c0_i32_1 = arith.constant 0 : i32
    return %c0_i32, %c0_i32_0 : i32, i32
  }
  func.func @transform_11(%arg0: i32) -> (i32, i32) {
    %c0_i32 = arith.constant 0 : i32
    %c0_i32_0 = arith.constant 0 : i32
    %c0_i32_1 = arith.constant 0 : i32
    return %c0_i32, %c0_i32_0 : i32, i32
  }
  func.func @transform_12(%arg0: i32) -> (i32, i32) {
    %c0_i32 = arith.constant 0 : i32
    %c0_i32_0 = arith.constant 0 : i32
    %c0_i32_1 = arith.constant 0 : i32
    return %c0_i32, %c0_i32_0 : i32, i32
  }
  func.func @transform_13(%arg0: i32) -> (i32, i32) {
    %c0_i32 = arith.constant 0 : i32
    %c0_i32_0 = arith.constant 0 : i32
    return %c0_i32, %arg0 : i32, i32
  }
}

</mosaic_0001>

<llo_original>
// kernel: mynn_forward.1
$region0: #{mynn_forward.1}
  #allocation0 [shape = 'u32[]', space=smem, size = 0x4, offset = 0x4, fixed_abs, tag = 'smem constant byte address 0x4 - core index']
  #allocation1 [shape = 'u32[144,128]{1,0:T(1,128)}', space=vmem, size = 0x12000, scoped, tag = 'internal scratch']
  %s0 = inlined_call_operand.vmem [shape: f32[12,128], index: 0, kind: input, shape index: {}]
  %s1 = inlined_call_operand.vmem [shape: f32[4,12], index: 1, kind: input, shape index: {}]
  %s2 = inlined_call_operand.vmem [shape: f32[4,1], index: 2, kind: input, shape index: {}]
  %s3 = inlined_call_operand.vmem [shape: f32[4,4], index: 3, kind: input, shape index: {}]
  %s4 = inlined_call_operand.vmem [shape: f32[4,1], index: 4, kind: input, shape index: {}]
  %s5 = inlined_call_operand.vmem [shape: f32[4,4], index: 5, kind: input, shape index: {}]
  %s6 = inlined_call_operand.vmem [shape: f32[4,1], index: 6, kind: input, shape index: {}]
  %s7 = inlined_call_operand.vmem [shape: f32[4,4], index: 7, kind: input, shape index: {}]
  %s8 = inlined_call_operand.vmem [shape: f32[4,1], index: 8, kind: input, shape index: {}]
  %s9 = inlined_call_operand.vmem [shape: f32[4,4], index: 9, kind: input, shape index: {}]
  %s10 = inlined_call_operand.vmem [shape: f32[4,1], index: 10, kind: input, shape index: {}]
  %s11 = inlined_call_operand.vmem [shape: f32[18,4], index: 11, kind: input, shape index: {}]
  %s12 = inlined_call_operand.vmem [shape: f32[18,1], index: 12, kind: input, shape index: {}]
  %s13 = inlined_call_operand.vmem [shape: f32[18,128], index: 13, kind: output, shape index: {}]
  %s14 = sld [smem:[#allocation0]]
  $region62: #{mynn_forward.1} parent=0
    _
  %s16 = ssub.s32 1, %s14
  %s17 = scalar_select 0, %s16, %s14
  // Predicated region
  $region2: #{mynn_forward.1} parent=0 // pred_check
    _
  $region3: #{mynn_forward.1} parent=0 // pred_check_branch
    %19 = sbr.rel (0) target = $region5
  $region4: #{mynn_forward.1} parent=0 // pred_region
    _
  $region5: #{mynn_forward.1} parent=0 // pred_fallthru
    _
  // Predicated region
  $region6: #{mynn_forward.1} parent=0 // pred_check
    _
  $region7: #{mynn_forward.1} parent=0 // pred_check_branch
    %21 = sbr.rel (0) target = $region9
  $region8: #{mynn_forward.1} parent=0 // pred_region
    _
  $region9: #{mynn_forward.1} parent=0 // pred_fallthru
    _
  // Predicated region
  $region10: #{mynn_forward.1} parent=0 // pred_check
    _
  $region11: #{mynn_forward.1} parent=0 // pred_check_branch
    %23 = sbr.rel (0) target = $region13
  $region12: #{mynn_forward.1} parent=0 // pred_region
    _
  $region13: #{mynn_forward.1} parent=0 // pred_fallthru
    _
  // Predicated region
  $region14: #{mynn_forward.1} parent=0 // pred_check
    _
  $region15: #{mynn_forward.1} parent=0 // pred_check_branch
    %25 = sbr.rel (0) target = $region17
  $region16: #{mynn_forward.1} parent=0 // pred_region
    _
  $region17: #{mynn_forward.1} parent=0 // pred_fallthru
    _
  // Predicated region
  $region18: #{mynn_forward.1} parent=0 // pred_check
    _
  $region19: #{mynn_forward.1} parent=0 // pred_check_branch
    %27 = sbr.rel (0) target = $region21
  $region20: #{mynn_forward.1} parent=0 // pred_region
    _
  $region21: #{mynn_forward.1} parent=0 // pred_fallthru
    _
  // Predicated region
  $region22: #{mynn_forward.1} parent=0 // pred_check
    _
  $region23: #{mynn_forward.1} parent=0 // pred_check_branch
    %29 = sbr.rel (0) target = $region25
  $region24: #{mynn_forward.1} parent=0 // pred_region
    _
  $region25: #{mynn_forward.1} parent=0 // pred_fallthru
    _
  // Predicated region
  $region26: #{mynn_forward.1} parent=0 // pred_check
    _
  $region27: #{mynn_forward.1} parent=0 // pred_check_branch
    %31 = sbr.rel (0) target = $region29
  $region28: #{mynn_forward.1} parent=0 // pred_region
    _
  $region29: #{mynn_forward.1} parent=0 // pred_fallthru
    _
  // Predicated region
  $region30: #{mynn_forward.1} parent=0 // pred_check
    _
  $region31: #{mynn_forward.1} parent=0 // pred_check_branch
    %33 = sbr.rel (0) target = $region33
  $region32: #{mynn_forward.1} parent=0 // pred_region
    _
  $region33: #{mynn_forward.1} parent=0 // pred_fallthru
    _
  // Predicated region
  $region34: #{mynn_forward.1} parent=0 // pred_check
    _
  $region35: #{mynn_forward.1} parent=0 // pred_check_branch
    %35 = sbr.rel (0) target = $region37
  $region36: #{mynn_forward.1} parent=0 // pred_region
    _
  $region37: #{mynn_forward.1} parent=0 // pred_fallthru
    _
  // Predicated region
  $region38: #{mynn_forward.1} parent=0 // pred_check
    _
  $region39: #{mynn_forward.1} parent=0 // pred_check_branch
    %37 = sbr.rel (0) target = $region41
  $region40: #{mynn_forward.1} parent=0 // pred_region
    _
  $region41: #{mynn_forward.1} parent=0 // pred_fallthru
    _
  // Predicated region
  $region42: #{mynn_forward.1} parent=0 // pred_check
    _
  $region43: #{mynn_forward.1} parent=0 // pred_check_branch
    %39 = sbr.rel (0) target = $region45
  $region44: #{mynn_forward.1} parent=0 // pred_region
    _
  $region45: #{mynn_forward.1} parent=0 // pred_fallthru
    _
  // Predicated region
  $region46: #{mynn_forward.1} parent=0 // pred_check
    _
  $region47: #{mynn_forward.1} parent=0 // pred_check_branch
    %41 = sbr.rel (0) target = $region49
  $region48: #{mynn_forward.1} parent=0 // pred_region
    _
  $region49: #{mynn_forward.1} parent=0 // pred_fallthru
    _
  // Predicated region
  $region50: #{mynn_forward.1} parent=0 // pred_check
    _
  $region51: #{mynn_forward.1} parent=0 // pred_check_branch
    %43 = sbr.rel (0) target = $region53
  $region52: #{mynn_forward.1} parent=0 // pred_region
    _
  $region53: #{mynn_forward.1} parent=0 // pred_fallthru
    _
  %v44 = vld [vmem:[%s0] sm:$0xff]
  %v45 = vld [vmem:[%s0 + $0x8] sm:$0xf]
  %v46 = vld [vmem:[%s1] sm:$0xf]
  %v47 = vld [vmem:[%s2] sm:$0xf]
  %49 = vset.pattern.permute.xlu0 0
  %50 = vperm.xlu0 %49, %v47
  %v51 = vpop.permute.xlu0 %50
  %vm53 = vcmask 97280
  %v55 = vsel %vm53, %v46, 0
  %vm57 = vcmask 1043456
  %v59 = vsel %vm57, %v45, 0
  %61 = vmatprep.subr.mxu0 0.0
  %62 = vmatpush1.msra.mxu0 %v44
  %63 = vmatprep.subr.mxu0 0.0
  %64 = vmatpush1.msra.mxu0 %v59
  %65 = vmatprep.subr.mxu0 0.0
  %66 = vmatpush1.msra.mxu0 0.0
  %67 = vmatprep.subr.mxu0 0.0
  %68 = vmatpush1.msra.mxu0 0.0
  %69 = vmatprep.subr.mxu0 0.0
  %70 = vmatpush1.msra.mxu0 0.0
  %71 = vmatprep.subr.mxu0 0.0
  %72 = vmatpush1.msra.mxu0 0.0
  %73 = vmatprep.subr.mxu0 0.0
  %74 = vmatpush1.msra.mxu0 0.0
  %75 = vmatprep.subr.mxu0 0.0
  %76 = vmatpush1.msra.mxu0 0.0
  %77 = vmatprep.subr.mxu0 0.0
  %78 = vmatpush1.msra.mxu0 0.0
  %79 = vmatprep.subr.mxu0 0.0
  %80 = vmatpush1.msra.mxu0 0.0
  %81 = vmatprep.subr.mxu0 0.0
  %82 = vmatpush1.msra.mxu0 0.0
  %83 = vmatprep.subr.mxu0 0.0
  %84 = vmatpush1.msra.mxu0 0.0
  %85 = vmatprep.subr.mxu0 0.0
  %86 = vmatpush1.msra.mxu0 0.0
  %87 = vmatprep.subr.mxu0 0.0
  %88 = vmatpush1.msra.mxu0 0.0
  %89 = vmatprep.subr.mxu0 0.0
  %90 = vmatpush1.msra.mxu0 0.0
  %91 = vmatprep.subr.mxu0 0.0
  %92 = vmatpush1.msra.mxu0 0.0
  %93 = vmatprep.subr.mxu0 0.0
  %94 = vmatpush1.msra.mxu0 0.0
  %95 = vmatprep.subr.mxu0 0.0
  %96 = vmatpush1.msra.mxu0 0.0
  %97 = vmatprep.subr.mxu0 0.0
  %98 = vmatpush1.msra.mxu0 0.0
  %99 = vmatprep.subr.mxu0 0.0
  %100 = vmatpush1.msra.mxu0 0.0
  %101 = vmatprep.subr.mxu0 0.0
  %102 = vmatpush1.msra.mxu0 0.0
  %103 = vmatprep.subr.mxu0 0.0
  %104 = vmatpush1.msra.mxu0 0.0
  %105 = vmatprep.subr.mxu0 0.0
  %106 = vmatpush1.msra.mxu0 0.0
  %107 = vmatprep.subr.mxu0 0.0
  %108 = vmatpush1.msra.mxu0 0.0
  %109 = vmatprep.subr.mxu0 0.0
  %110 = vmatpush1.msra.mxu0 0.0
  %111 = vmatprep.subr.mxu0 0.0
  %112 = vmatpush1.msra.mxu0 0.0
  %113 = vmatprep.subr.mxu0 0.0
  %114 = vmatpush1.msra.mxu0 0.0
  %115 = vmatprep.subr.mxu0 0.0
  %116 = vmatpush1.msra.mxu0 0.0
  %117 = vmatprep.subr.mxu0 0.0
  %118 = vmatpush1.msra.mxu0 0.0
  %119 = vmatprep.subr.mxu0 0.0
  %120 = vmatpush1.msra.mxu0 0.0
  %121 = vmatprep.subr.mxu0 0.0
  %122 = vmatpush1.msra.mxu0 0.0
  %123 = vmatprep.subr.mxu0 0.0
  %124 = vmatpush1.msra.mxu0 0.0
  %125 = vmatprep.mubr.f32.mxu0 0.0
  %126 = vmatmul.mubr.f32.gmra.mrb[0].mxu0 %v55
  %v127 = vpop.f32.mrb[0].mxu0
  %v128 = vadd.f32 %v51, %v127
  %v129 = vpop.f32.mrb[0].mxu0
  %130 = vdwg.mxu0
  %v131 = vmax.f32 %v128, 0.0
  %v132 = vld [vmem:[%s3] sm:$0xf]
  %v133 = vld [vmem:[%s4] sm:$0xf]
  %135 = vset.pattern.permute.xlu0 0
  %136 = vperm.xlu0 %135, %v133
  %v137 = vpop.permute.xlu0 %136
  %vm139 = vcmask 31744
  %v141 = vsel %vm139, %v132, 0
  %v144 = vsel %vm57, %v131, 0
  %146 = vmatprep.subr.mxu0 0.0
  %147 = vmatpush1.msra.mxu0 %v144
  %148 = vmatprep.subr.mxu0 0.0
  %149 = vmatpush1.msra.mxu0 0.0
  %150 = vmatprep.subr.mxu0 0.0
  %151 = vmatpush1.msra.mxu0 0.0
  %152 = vmatprep.subr.mxu0 0.0
  %153 = vmatpush1.msra.mxu0 0.0
  %154 = vmatprep.subr.mxu0 0.0
  %155 = vmatpush1.msra.mxu0 0.0
  %156 = vmatprep.subr.mxu0 0.0
  %157 = vmatpush1.msra.mxu0 0.0
  %158 = vmatprep.subr.mxu0 0.0
  %159 = vmatpush1.msra.mxu0 0.0
  %160 = vmatprep.subr.mxu0 0.0
  %161 = vmatpush1.msra.mxu0 0.0
  %162 = vmatprep.subr.mxu0 0.0
  %163 = vmatpush1.msra.mxu0 0.0
  %164 = vmatprep.subr.mxu0 0.0
  %165 = vmatpush1.msra.mxu0 0.0
  %166 = vmatprep.subr.mxu0 0.0
  %167 = vmatpush1.msra.mxu0 0.0
  %168 = vmatprep.subr.mxu0 0.0
  %169 = vmatpush1.msra.mxu0 0.0
  %170 = vmatprep.subr.mxu0 0.0
  %171 = vmatpush1.msra.mxu0 0.0
  %172 = vmatprep.subr.mxu0 0.0
  %173 = vmatpush1.msra.mxu0 0.0
  %174 = vmatprep.subr.mxu0 0.0
  %175 = vmatpush1.msra.mxu0 0.0
  %176 = vmatprep.subr.mxu0 0.0
  %177 = vmatpush1.msra.mxu0 0.0
  %178 = vmatprep.subr.mxu0 0.0
  %179 = vmatpush1.msra.mxu0 0.0
  %180 = vmatprep.subr.mxu0 0.0
  %181 = vmatpush1.msra.mxu0 0.0
  %182 = vmatprep.subr.mxu0 0.0
  %183 = vmatpush1.msra.mxu0 0.0
  %184 = vmatprep.subr.mxu0 0.0
  %185 = vmatpush1.msra.mxu0 0.0
  %186 = vmatprep.subr.mxu0 0.0
  %187 = vmatpush1.msra.mxu0 0.0
  %188 = vmatprep.subr.mxu0 0.0
  %189 = vmatpush1.msra.mxu0 0.0
  %190 = vmatprep.subr.mxu0 0.0
  %191 = vmatpush1.msra.mxu0 0.0
  %192 = vmatprep.subr.mxu0 0.0
  %193 = vmatpush1.msra.mxu0 0.0
  %194 = vmatprep.subr.mxu0 0.0
  %195 = vmatpush1.msra.mxu0 0.0
  %196 = vmatprep.subr.mxu0 0.0
  %197 = vmatpush1.msra.mxu0 0.0
  %198 = vmatprep.subr.mxu0 0.0
  %199 = vmatpush1.msra.mxu0 0.0
  %200 = vmatprep.subr.mxu0 0.0
  %201 = vmatpush1.msra.mxu0 0.0
  %202 = vmatprep.subr.mxu0 0.0
  %203 = vmatpush1.msra.mxu0 0.0
  %204 = vmatprep.subr.mxu0 0.0
  %205 = vmatpush1.msra.mxu0 0.0
  %206 = vmatprep.subr.mxu0 0.0
  %207 = vmatpush1.msra.mxu0 0.0
  %208 = vmatprep.subr.mxu0 0.0
  %209 = vmatpush1.msra.mxu0 0.0
  %210 = vmatprep.mubr.f32.mxu0 0.0
  %211 = vmatmul.mubr.f32.gmra.mrb[0].mxu0 %v141
  %v212 = vpop.f32.mrb[0].mxu0
  %v213 = vadd.f32 %v137, %v212
  %v214 = vpop.f32.mrb[0].mxu0
  %215 = vdwg.mxu0
  %v216 = vmax.f32 %v213, 0.0
  %v217 = vld [vmem:[%s5] sm:$0xf]
  %v218 = vld [vmem:[%s6] sm:$0xf]
  %220 = vset.pattern.permute.xlu0 0
  %221 = vperm.xlu0 %220, %v218
  %v222 = vpop.permute.xlu0 %221
  %v225 = vsel %vm139, %v217, 0
  %v228 = vsel %vm57, %v216, 0
  %230 = vmatprep.subr.mxu0 0.0
  %231 = vmatpush1.msra.mxu0 %v228
  %232 = vmatprep.subr.mxu0 0.0
  %233 = vmatpush1.msra.mxu0 0.0
  %234 = vmatprep.subr.mxu0 0.0
  %235 = vmatpush1.msra.mxu0 0.0
  %236 = vmatprep.subr.mxu0 0.0
  %237 = vmatpush1.msra.mxu0 0.0
  %238 = vmatprep.subr.mxu0 0.0
  %239 = vmatpush1.msra.mxu0 0.0
  %240 = vmatprep.subr.mxu0 0.0
  %241 = vmatpush1.msra.mxu0 0.0
  %242 = vmatprep.subr.mxu0 0.0
  %243 = vmatpush1.msra.mxu0 0.0
  %244 = vmatprep.subr.mxu0 0.0
  %245 = vmatpush1.msra.mxu0 0.0
  %246 = vmatprep.subr.mxu0 0.0
  %247 = vmatpush1.msra.mxu0 0.0
  %248 = vmatprep.subr.mxu0 0.0
  %249 = vmatpush1.msra.mxu0 0.0
  %250 = vmatprep.subr.mxu0 0.0
  %251 = vmatpush1.msra.mxu0 0.0
  %252 = vmatprep.subr.mxu0 0.0
  %253 = vmatpush1.msra.mxu0 0.0
  %254 = vmatprep.subr.mxu0 0.0
  %255 = vmatpush1.msra.mxu0 0.0
  %256 = vmatprep.subr.mxu0 0.0
  %257 = vmatpush1.msra.mxu0 0.0
  %258 = vmatprep.subr.mxu0 0.0
  %259 = vmatpush1.msra.mxu0 0.0
  %260 = vmatprep.subr.mxu0 0.0
  %261 = vmatpush1.msra.mxu0 0.0
  %262 = vmatprep.subr.mxu0 0.0
  %263 = vmatpush1.msra.mxu0 0.0
  %264 = vmatprep.subr.mxu0 0.0
  %265 = vmatpush1.msra.mxu0 0.0
  %266 = vmatprep.subr.mxu0 0.0
  %267 = vmatpush1.msra.mxu0 0.0
  %268 = vmatprep.subr.mxu0 0.0
  %269 = vmatpush1.msra.mxu0 0.0
  %270 = vmatprep.subr.mxu0 0.0
  %271 = vmatpush1.msra.mxu0 0.0
  %272 = vmatprep.subr.mxu0 0.0
  %273 = vmatpush1.msra.mxu0 0.0
  %274 = vmatprep.subr.mxu0 0.0
  %275 = vmatpush1.msra.mxu0 0.0
  %276 = vmatprep.subr.mxu0 0.0
  %277 = vmatpush1.msra.mxu0 0.0
  %278 = vmatprep.subr.mxu0 0.0
  %279 = vmatpush1.msra.mxu0 0.0
  %280 = vmatprep.subr.mxu0 0.0
  %281 = vmatpush1.msra.mxu0 0.0
  %282 = vmatprep.subr.mxu0 0.0
  %283 = vmatpush1.msra.mxu0 0.0
  %284 = vmatprep.subr.mxu0 0.0
  %285 = vmatpush1.msra.mxu0 0.0
  %286 = vmatprep.subr.mxu0 0.0
  %287 = vmatpush1.msra.mxu0 0.0
  %288 = vmatprep.subr.mxu0 0.0
  %289 = vmatpush1.msra.mxu0 0.0
  %290 = vmatprep.subr.mxu0 0.0
  %291 = vmatpush1.msra.mxu0 0.0
  %292 = vmatprep.subr.mxu0 0.0
  %293 = vmatpush1.msra.mxu0 0.0
  %294 = vmatprep.mubr.f32.mxu0 0.0
  %295 = vmatmul.mubr.f32.gmra.mrb[0].mxu0 %v225
  %v296 = vpop.f32.mrb[0].mxu0
  %v297 = vadd.f32 %v222, %v296
  %v298 = vpop.f32.mrb[0].mxu0
  %299 = vdwg.mxu0
  %v300 = vmax.f32 %v297, 0.0
  %v301 = vld [vmem:[%s7] sm:$0xf]
  %v302 = vld [vmem:[%s8] sm:$0xf]
  %304 = vset.pattern.permute.xlu0 0
  %305 = vperm.xlu0 %304, %v302
  %v306 = vpop.permute.xlu0 %305
  %v309 = vsel %vm139, %v301, 0
  %v312 = vsel %vm57, %v300, 0
  %314 = vmatprep.subr.mxu0 0.0
  %315 = vmatpush1.msra.mxu0 %v312
  %316 = vmatprep.subr.mxu0 0.0
  %317 = vmatpush1.msra.mxu0 0.0
  %318 = vmatprep.subr.mxu0 0.0
  %319 = vmatpush1.msra.mxu0 0.0
  %320 = vmatprep.subr.mxu0 0.0
  %321 = vmatpush1.msra.mxu0 0.0
  %322 = vmatprep.subr.mxu0 0.0
  %323 = vmatpush1.msra.mxu0 0.0
  %324 = vmatprep.subr.mxu0 0.0
  %325 = vmatpush1.msra.mxu0 0.0
  %326 = vmatprep.subr.mxu0 0.0
  %327 = vmatpush1.msra.mxu0 0.0
  %328 = vmatprep.subr.mxu0 0.0
  %329 = vmatpush1.msra.mxu0 0.0
  %330 = vmatprep.subr.mxu0 0.0
  %331 = vmatpush1.msra.mxu0 0.0
  %332 = vmatprep.subr.mxu0 0.0
  %333 = vmatpush1.msra.mxu0 0.0
  %334 = vmatprep.subr.mxu0 0.0
  %335 = vmatpush1.msra.mxu0 0.0
  %336 = vmatprep.subr.mxu0 0.0
  %337 = vmatpush1.msra.mxu0 0.0
  %338 = vmatprep.subr.mxu0 0.0
  %339 = vmatpush1.msra.mxu0 0.0
  %340 = vmatprep.subr.mxu0 0.0
  %341 = vmatpush1.msra.mxu0 0.0
  %342 = vmatprep.subr.mxu0 0.0
  %343 = vmatpush1.msra.mxu0 0.0
  %344 = vmatprep.subr.mxu0 0.0
  %345 = vmatpush1.msra.mxu0 0.0
  %346 = vmatprep.subr.mxu0 0.0
  %347 = vmatpush1.msra.mxu0 0.0
  %348 = vmatprep.subr.mxu0 0.0
  %349 = vmatpush1.msra.mxu0 0.0
  %350 = vmatprep.subr.mxu0 0.0
  %351 = vmatpush1.msra.mxu0 0.0
  %352 = vmatprep.subr.mxu0 0.0
  %353 = vmatpush1.msra.mxu0 0.0
  %354 = vmatprep.subr.mxu0 0.0
  %355 = vmatpush1.msra.mxu0 0.0
  %356 = vmatprep.subr.mxu0 0.0
  %357 = vmatpush1.msra.mxu0 0.0
  %358 = vmatprep.subr.mxu0 0.0
  %359 = vmatpush1.msra.mxu0 0.0
  %360 = vmatprep.subr.mxu0 0.0
  %361 = vmatpush1.msra.mxu0 0.0
  %362 = vmatprep.subr.mxu0 0.0
  %363 = vmatpush1.msra.mxu0 0.0
  %364 = vmatprep.subr.mxu0 0.0
  %365 = vmatpush1.msra.mxu0 0.0
  %366 = vmatprep.subr.mxu0 0.0
  %367 = vmatpush1.msra.mxu0 0.0
  %368 = vmatprep.subr.mxu0 0.0
  %369 = vmatpush1.msra.mxu0 0.0
  %370 = vmatprep.subr.mxu0 0.0
  %371 = vmatpush1.msra.mxu0 0.0
  %372 = vmatprep.subr.mxu0 0.0
  %373 = vmatpush1.msra.mxu0 0.0
  %374 = vmatprep.subr.mxu0 0.0
  %375 = vmatpush1.msra.mxu0 0.0
  %376 = vmatprep.subr.mxu0 0.0
  %377 = vmatpush1.msra.mxu0 0.0
  %378 = vmatprep.mubr.f32.mxu0 0.0
  %379 = vmatmul.mubr.f32.gmra.mrb[0].mxu0 %v309
  %v380 = vpop.f32.mrb[0].mxu0
  %v381 = vadd.f32 %v306, %v380
  %v382 = vpop.f32.mrb[0].mxu0
  %383 = vdwg.mxu0
  %v384 = vmax.f32 %v381, 0.0
  %v385 = vld [vmem:[%s9] sm:$0xf]
  %v386 = vld [vmem:[%s10] sm:$0xf]
  %388 = vset.pattern.permute.xlu0 0
  %389 = vperm.xlu0 %388, %v386
  %v390 = vpop.permute.xlu0 %389
  %v393 = vsel %vm139, %v385, 0
  %v396 = vsel %vm57, %v384, 0
  %398 = vmatprep.subr.mxu0 0.0
  %399 = vmatpush1.msra.mxu0 %v396
  %400 = vmatprep.subr.mxu0 0.0
  %401 = vmatpush1.msra.mxu0 0.0
  %402 = vmatprep.subr.mxu0 0.0
  %403 = vmatpush1.msra.mxu0 0.0
  %404 = vmatprep.subr.mxu0 0.0
  %405 = vmatpush1.msra.mxu0 0.0
  %406 = vmatprep.subr.mxu0 0.0
  %407 = vmatpush1.msra.mxu0 0.0
  %408 = vmatprep.subr.mxu0 0.0
  %409 = vmatpush1.msra.mxu0 0.0
  %410 = vmatprep.subr.mxu0 0.0
  %411 = vmatpush1.msra.mxu0 0.0
  %412 = vmatprep.subr.mxu0 0.0
  %413 = vmatpush1.msra.mxu0 0.0
  %414 = vmatprep.subr.mxu0 0.0
  %415 = vmatpush1.msra.mxu0 0.0
  %416 = vmatprep.subr.mxu0 0.0
  %417 = vmatpush1.msra.mxu0 0.0
  %418 = vmatprep.subr.mxu0 0.0
  %419 = vmatpush1.msra.mxu0 0.0
  %420 = vmatprep.subr.mxu0 0.0
  %421 = vmatpush1.msra.mxu0 0.0
  %422 = vmatprep.subr.mxu0 0.0
  %423 = vmatpush1.msra.mxu0 0.0
  %424 = vmatprep.subr.mxu0 0.0
  %425 = vmatpush1.msra.mxu0 0.0
  %426 = vmatprep.subr.mxu0 0.0
  %427 = vmatpush1.msra.mxu0 0.0
  %428 = vmatprep.subr.mxu0 0.0
  %429 = vmatpush1.msra.mxu0 0.0
  %430 = vmatprep.subr.mxu0 0.0
  %431 = vmatpush1.msra.mxu0 0.0
  %432 = vmatprep.subr.mxu0 0.0
  %433 = vmatpush1.msra.mxu0 0.0
  %434 = vmatprep.subr.mxu0 0.0
  %435 = vmatpush1.msra.mxu0 0.0
  %436 = vmatprep.subr.mxu0 0.0
  %437 = vmatpush1.msra.mxu0 0.0
  %438 = vmatprep.subr.mxu0 0.0
  %439 = vmatpush1.msra.mxu0 0.0
  %440 = vmatprep.subr.mxu0 0.0
  %441 = vmatpush1.msra.mxu0 0.0
  %442 = vmatprep.subr.mxu0 0.0
  %443 = vmatpush1.msra.mxu0 0.0
  %444 = vmatprep.subr.mxu0 0.0
  %445 = vmatpush1.msra.mxu0 0.0
  %446 = vmatprep.subr.mxu0 0.0
  %447 = vmatpush1.msra.mxu0 0.0
  %448 = vmatprep.subr.mxu0 0.0
  %449 = vmatpush1.msra.mxu0 0.0
  %450 = vmatprep.subr.mxu0 0.0
  %451 = vmatpush1.msra.mxu0 0.0
  %452 = vmatprep.subr.mxu0 0.0
  %453 = vmatpush1.msra.mxu0 0.0
  %454 = vmatprep.subr.mxu0 0.0
  %455 = vmatpush1.msra.mxu0 0.0
  %456 = vmatprep.subr.mxu0 0.0
  %457 = vmatpush1.msra.mxu0 0.0
  %458 = vmatprep.subr.mxu0 0.0
  %459 = vmatpush1.msra.mxu0 0.0
  %460 = vmatprep.subr.mxu0 0.0
  %461 = vmatpush1.msra.mxu0 0.0
  %462 = vmatprep.mubr.f32.mxu0 0.0
  %463 = vmatmul.mubr.f32.gmra.mrb[0].mxu0 %v393
  %v464 = vpop.f32.mrb[0].mxu0
  %v465 = vadd.f32 %v390, %v464
  %v466 = vpop.f32.mrb[0].mxu0
  %467 = vdwg.mxu0
  %v468 = vmax.f32 %v465, 0.0
  %v469 = vld [vmem:[%s11] sm:$0xff]
  %v470 = vld [vmem:[%s11 + $0x8] sm:$0xff]
  %v471 = vld [vmem:[%s11 + $0x10] sm:$0x3]
  %v472 = vld [vmem:[%s12] sm:$0xff]
  %v473 = vld [vmem:[%s12 + $0x8] sm:$0xff]
  %v474 = vld [vmem:[%s12 + $0x10] sm:$0x3]
  %476 = vset.pattern.permute.xlu0 0
  %477 = vperm.xlu0 %476, %v472
  %v478 = vpop.permute.xlu0 %477
  %481 = vset.pattern.permute.xlu0 0
  %482 = vperm.xlu0 %481, %v473
  %v483 = vpop.permute.xlu0 %482
  %486 = vset.pattern.permute.xlu0 0
  %487 = vperm.xlu0 %486, %v474
  %v488 = vpop.permute.xlu0 %487
  %v491 = vsel %vm139, %v469, 0
  %v494 = vsel %vm139, %v470, 0
  %v497 = vsel %vm139, %v471, 0
  %v500 = vsel %vm57, %v468, 0
  %502 = vmatprep.subr.mxu0 0.0
  %503 = vmatpush1.msra.mxu0 %v500
  %504 = vmatprep.subr.mxu0 0.0
  %505 = vmatpush1.msra.mxu0 0.0
  %506 = vmatprep.subr.mxu0 0.0
  %507 = vmatpush1.msra.mxu0 0.0
  %508 = vmatprep.subr.mxu0 0.0
  %509 = vmatpush1.msra.mxu0 0.0
  %510 = vmatprep.subr.mxu0 0.0
  %511 = vmatpush1.msra.mxu0 0.0
  %512 = vmatprep.subr.mxu0 0.0
  %513 = vmatpush1.msra.mxu0 0.0
  %514 = vmatprep.subr.mxu0 0.0
  %515 = vmatpush1.msra.mxu0 0.0
  %516 = vmatprep.subr.mxu0 0.0
  %517 = vmatpush1.msra.mxu0 0.0
  %518 = vmatprep.subr.mxu0 0.0
  %519 = vmatpush1.msra.mxu0 0.0
  %520 = vmatprep.subr.mxu0 0.0
  %521 = vmatpush1.msra.mxu0 0.0
  %522 = vmatprep.subr.mxu0 0.0
  %523 = vmatpush1.msra.mxu0 0.0
  %524 = vmatprep.subr.mxu0 0.0
  %525 = vmatpush1.msra.mxu0 0.0
  %526 = vmatprep.subr.mxu0 0.0
  %527 = vmatpush1.msra.mxu0 0.0
  %528 = vmatprep.subr.mxu0 0.0
  %529 = vmatpush1.msra.mxu0 0.0
  %530 = vmatprep.subr.mxu0 0.0
  %531 = vmatpush1.msra.mxu0 0.0
  %532 = vmatprep.subr.mxu0 0.0
  %533 = vmatpush1.msra.mxu0 0.0
  %534 = vmatprep.subr.mxu0 0.0
  %535 = vmatpush1.msra.mxu0 0.0
  %536 = vmatprep.subr.mxu0 0.0
  %537 = vmatpush1.msra.mxu0 0.0
  %538 = vmatprep.subr.mxu0 0.0
  %539 = vmatpush1.msra.mxu0 0.0
  %540 = vmatprep.subr.mxu0 0.0
  %541 = vmatpush1.msra.mxu0 0.0
  %542 = vmatprep.subr.mxu0 0.0
  %543 = vmatpush1.msra.mxu0 0.0
  %544 = vmatprep.subr.mxu0 0.0
  %545 = vmatpush1.msra.mxu0 0.0
  %546 = vmatprep.subr.mxu0 0.0
  %547 = vmatpush1.msra.mxu0 0.0
  %548 = vmatprep.subr.mxu0 0.0
  %549 = vmatpush1.msra.mxu0 0.0
  %550 = vmatprep.subr.mxu0 0.0
  %551 = vmatpush1.msra.mxu0 0.0
  %552 = vmatprep.subr.mxu0 0.0
  %553 = vmatpush1.msra.mxu0 0.0
  %554 = vmatprep.subr.mxu0 0.0
  %555 = vmatpush1.msra.mxu0 0.0
  %556 = vmatprep.subr.mxu0 0.0
  %557 = vmatpush1.msra.mxu0 0.0
  %558 = vmatprep.subr.mxu0 0.0
  %559 = vmatpush1.msra.mxu0 0.0
  %560 = vmatprep.subr.mxu0 0.0
  %561 = vmatpush1.msra.mxu0 0.0
  %562 = vmatprep.subr.mxu0 0.0
  %563 = vmatpush1.msra.mxu0 0.0
  %564 = vmatprep.subr.mxu0 0.0
  %565 = vmatpush1.msra.mxu0 0.0
  %566 = vmatprep.mubr.f32.mxu0 0.0
  %567 = vmatmul.mubr.f32.gmra.mrb[0].mxu0 %v491
  %v568 = vpop.f32.mrb[0].mxu0
  %v569 = vadd.f32 %v478, %v568
  %v570 = vpop.f32.mrb[0].mxu0
  %571 = vmatprep.mubr.f32.mxu0 0.0
  %572 = vmatmul.mubr.f32.gmra.mrb[0].mxu0 %v494
  %v573 = vpop.f32.mrb[0].mxu0
  %v574 = vadd.f32 %v483, %v573
  %v575 = vpop.f32.mrb[0].mxu0
  %576 = vmatprep.mubr.f32.mxu0 0.0
  %577 = vmatmul.mubr.f32.gmra.mrb[0].mxu0 %v497
  %v578 = vpop.f32.mrb[0].mxu0
  %v579 = vadd.f32 %v488, %v578
  %v580 = vpop.f32.mrb[0].mxu0
  %581 = vdwg.mxu0
  %582 = vst [vmem:[%s13] sm:$0xff] %v569
  %583 = vst [vmem:[%s13 + $0x8] sm:$0xff] %v574
  %584 = vst [vmem:[%s13 + $0x10] sm:$0x3] %v579
  // Predicated region
  $region54: #{mynn_forward.1} parent=0 // pred_check
    _
  $region55: #{mynn_forward.1} parent=0 // pred_check_branch
    %586 = sbr.rel (0) target = $region57
  $region56: #{mynn_forward.1} parent=0 // pred_region
    _
  $region57: #{mynn_forward.1} parent=0 // pred_fallthru
    _
  // Predicated region
  $region58: #{mynn_forward.1} parent=0 // pred_check
    _
  $region59: #{mynn_forward.1} parent=0 // pred_check_branch
    %588 = sbr.rel (0) target = $region61
  $region60: #{mynn_forward.1} parent=0 // pred_region
    _
  $region61: #{mynn_forward.1} parent=0 // pred_fallthru
    _

</llo_original>
